<compile_context>
chip_gen: v5e
topology: v5e:2x2
jax: 0.10.0
libtpu: 0.0.40
codegen_flags: <defaults>
</compile_context>

<pallas_src>
import numpy as np
import jax
import jax.numpy as jnp
from jax.experimental import pallas as pl
from jax.experimental.pallas import tpu as pltpu


_MAX_BLOCK_BYTES = 4 * 1024 * 1024    # ~4 MiB blocks: v5e-safe, near-roofline v6e, v7x sweet spot
_VMEM_LIMIT_BYTES = 32 * 1024 * 1024  # 2 arrays x 2 buffers x 4 MiB = 16 MiB -> 2x headroom
_LANE_CANDIDATES = (2048, 1024, 512, 256, 128)


def _copy_kernel(x_ref, o_ref):
    # Whole-block VMEM load + store; semantically a no-op on the values.
    o_ref[...] = x_ref[...]


def _sublane_pack(dtype) -> int:
    # Rows per packed sublane group: f32 -> 8, bf16/f16 -> 16, int8/fp8 -> 32.
    return max(8, 32 // max(1, jnp.dtype(dtype).itemsize))


def _choose_factorization(size: int, dtype):
    """Pick (rows, lanes): lanes % 128 == 0 and, preferably, rows % pack == 0
    so every block is made of full (pack, 128) tiles (unmasked vst, dense DMA).
    Prefers the widest pack-aligned lane width; falls back to the widest
    divisor if no pack-aligned factorization exists.  Returns None if the flat
    size is not a multiple of 128."""
    pack = _sublane_pack(dtype)
    best_loose = None
    for lanes in _LANE_CANDIDATES:
        if size % lanes:
            continue
        rows = size // lanes
        if rows % pack == 0:
            return rows, lanes
        if best_loose is None:
            best_loose = (rows, lanes)
    return best_loose


def _choose_row_block(rows: int, lanes: int, itemsize: int, pack: int) -> int:
    """Largest row block that (a) divides rows, (b) is sublane-pack aligned,
    (c) fits the per-block VMEM budget, and (d) when possible leaves >= 2 grid
    steps so v7x can split the stream across both TensorCores."""
    if rows <= pack or rows % pack:
        return rows  # tiny / odd row count: single full-extent block (always legal)
    row_bytes = lanes * itemsize
    max_rows = (_MAX_BLOCK_BYTES // row_bytes) // pack * pack
    max_rows = max(pack, min(rows, max_rows))
    single_step = None
    r = max_rows
    while r >= pack:
        if rows % r == 0:
            if rows // r >= 2:
                return r
            if single_step is None:
                single_step = r
        r -= pack
    return single_step if single_step is not None else rows


def _materialized_copy(x: jax.Array) -> jax.Array:
    """Gridded Pallas identity copy (only for callers needing a new buffer)."""
    size = x.size
    if size == 0:
        return x
    pack = _sublane_pack(x.dtype)
    fact = _choose_factorization(size, x.dtype)

    if fact is None:
        # Flat size not a multiple of 128: pad to a full (pack, 128) tile
        # multiple, run the gridded copy, slice back.  No aliasing here — the
        # pad already materializes a fresh buffer (robust, never VMEM-OOMs).
        tile = pack * 128
        padded = pl.cdiv(size, tile) * tile
        xf = jnp.pad(x.reshape(-1), (0, padded - size))
        rows, lanes = _choose_factorization(padded, x.dtype)
        block_rows = _choose_row_block(rows, lanes, x.dtype.itemsize, pack)
        y2d = pl.pallas_call(
            _copy_kernel,
            out_shape=jax.ShapeDtypeStruct((rows, lanes), x.dtype),
            grid=(rows // block_rows,),
            in_specs=[pl.BlockSpec((block_rows, lanes), lambda i: (i, 0))],
            out_specs=pl.BlockSpec((block_rows, lanes), lambda i: (i, 0)),
            compiler_params=pltpu.CompilerParams(
                dimension_semantics=("parallel",),
                vmem_limit_bytes=_VMEM_LIMIT_BYTES,
            ),
        )(xf.reshape(rows, lanes))
        return y2d.reshape(-1)[:size].reshape(x.shape)

    rows, lanes = fact
    block_rows = _choose_row_block(rows, lanes, x.dtype.itemsize, pack)
    x2d = x.reshape(rows, lanes)  # bitcast for default row-major layout
    y2d = pl.pallas_call(
        _copy_kernel,
        out_shape=jax.ShapeDtypeStruct((rows, lanes), x.dtype),
        grid=(rows // block_rows,),
        in_specs=[pl.BlockSpec((block_rows, lanes), lambda i: (i, 0))],
        out_specs=pl.BlockSpec((block_rows, lanes), lambda i: (i, 0)),
        input_output_aliases={0: 0},  # with donation: output reuses input HBM buffer
        compiler_params=pltpu.CompilerParams(
            dimension_semantics=("parallel",),
            vmem_limit_bytes=_VMEM_LIMIT_BYTES,
        ),
    )(x2d)
    return y2d.reshape(x.shape)


# Materializing identity copy.  Input donation is a hard requirement: the
# aliased output reuses the donated HBM buffer, so no defensive copy is added.
model_base_forward_copy = jax.jit(_materialized_copy, donate_argnums=0)


def model_base_forward(x: jax.Array) -> jax.Array:
    """Pallas analog of ModelBase.forward (body is `pass` -> no-op).

    Fast path per the perf review: zero HBM traffic — just return the input.
    Use `model_base_forward_copy` only if a materialized new buffer is needed.
    """
    return x


if __name__ == "__main__":
    key = jax.random.PRNGKey(0)
    # Small NCHW input consistent with a vision-style model base: B=2, C=4, H=W=16.
    x = jax.random.normal(key, (2, 4, 16, 16), dtype=jnp.float32)
    x_host = np.asarray(jax.device_get(x))  # host reference (x is donated below)

    # 1) The faithful no-op analog: zero bytes of HBM traffic, no kernel.
    y_fast = model_base_forward(x)
    assert y_fast is x

    # 2) The Pallas copy path (donated input -> aliased, in-place output).
    y = model_base_forward_copy(x)
    jax.block_until_ready(y)

    y_host = np.asarray(jax.device_get(y))
    assert y_host.shape == x_host.shape and y_host.dtype == x_host.dtype
    assert np.array_equal(y_host, x_host)

    print("KERNEL_OK")
</pallas_src>

<mosaic_0001>
module attributes {stable_mosaic.version = 11 : i64} {
  func.func @_copy_kernel(%arg0: i32, %arg1: memref<8x256xf32, #tpu.memory_space<vmem>>, %arg2: memref<8x256xf32, #tpu.memory_space<vmem>>) attributes {dimension_semantics = [#tpu.dimension_semantics<parallel>], iteration_bounds = array<i64: 1>, scalar_prefetch = 0 : i64, scratch_operands = 0 : i64, tpu.core_type = #tpu.core_type<tc>, window_params = [{transform_indices = @transform_0, window_bounds = array<i64: 8, 256>}, {transform_indices = @transform_1, window_bounds = array<i64: 8, 256>}]} {
    %c0 = arith.constant 0 : index
    %c0_0 = arith.constant 0 : index
    %0 = vector.load %arg1[%c0, %c0_0] : memref<8x256xf32, #tpu.memory_space<vmem>>, vector<8x256xf32>
    %c0_1 = arith.constant 0 : index
    %c0_2 = arith.constant 0 : index
    %1 = vector.load %arg2[%c0_1, %c0_2] : memref<8x256xf32, #tpu.memory_space<vmem>>, vector<8x256xf32>
    tpu.vector_store %arg2[%c0_1, %c0_2], %0 {strides = array<i32>} : memref<8x256xf32, #tpu.memory_space<vmem>>, vector<8x256xf32>,
    return
  }
  func.func @transform_0(%arg0: i32) -> (i32, i32) {
    %c0_i32 = arith.constant 0 : i32
    %c0_i32_0 = arith.constant 0 : i32
    return %arg0, %c0_i32 : i32, i32
  }
  func.func @transform_1(%arg0: i32) -> (i32, i32) {
    %c0_i32 = arith.constant 0 : i32
    %c0_i32_0 = arith.constant 0 : i32
    return %arg0, %c0_i32 : i32, i32
  }
}

</mosaic_0001>

<llo_original>
// kernel: _materialized_copy.1
$region0: #{_materialized_copy.1}
  #allocation0 [shape = 'u32[]', space=smem, size = 0x4, offset = 0x4, fixed_abs, tag = 'smem constant byte address 0x4 - core index']
  #allocation1 [shape = 'u32[72,128]{1,0:T(1,128)}', space=vmem, size = 0x9000, scoped, tag = 'internal scratch']
  %s0 = inlined_call_operand.vmem [shape: f32[8,256], index: 0, kind: input, shape index: {}, may-alias: {0,1}]
  %s1 = inlined_call_operand.vmem [shape: f32[8,256], index: 1, kind: output, shape index: {}, may-alias: {0,1}]
  %s2 = sld [smem:[#allocation0]]
  $region14: #{_materialized_copy.1} parent=0
    _
  %s4 = ssub.s32 1, %s2
  %s5 = scalar_select 0, %s4, %s2
  // Predicated region
  $region2: #{_materialized_copy.1} parent=0 // pred_check
    _
  $region3: #{_materialized_copy.1} parent=0 // pred_check_branch
    %7 = sbr.rel (0) target = $region5
  $region4: #{_materialized_copy.1} parent=0 // pred_region
    _
  $region5: #{_materialized_copy.1} parent=0 // pred_fallthru
    _
  %v8 = vld [vmem:[%s0] sm:$0xff]
  %v9 = vld [vmem:[%s0 + $0x8] sm:$0xff]
  %10 = vst [vmem:[%s1] sm:$0xff] %v8
  %11 = vst [vmem:[%s1 + $0x8] sm:$0xff] %v9
  // Predicated region
  $region6: #{_materialized_copy.1} parent=0 // pred_check
    _
  $region7: #{_materialized_copy.1} parent=0 // pred_check_branch
    %13 = sbr.rel (0) target = $region9
  $region8: #{_materialized_copy.1} parent=0 // pred_region
    _
  $region9: #{_materialized_copy.1} parent=0 // pred_fallthru
    _
  // Predicated region
  $region10: #{_materialized_copy.1} parent=0 // pred_check
    _
  $region11: #{_materialized_copy.1} parent=0 // pred_check_branch
    %15 = sbr.rel (0) target = $region13
  $region12: #{_materialized_copy.1} parent=0 // pred_region
    _
  $region13: #{_materialized_copy.1} parent=0 // pred_fallthru
    _

</llo_original>
